<compile_context>
chip_gen: v7x
topology: tpu7x:2x2x1
jax: 0.10.0
libtpu: 0.0.40
codegen_flags: <defaults>
</compile_context>

<pallas_src>
import functools

import jax
import jax.numpy as jnp
from jax.experimental import pallas as pl
from jax.experimental.pallas import tpu as pltpu

_NEG = -1e30  # "minus infinity" pad value that stays finite in f32/bf16 arithmetic


def _round_up(x, m):
    return (x + m - 1) // m * m


def _vmem_budget_bytes():
    """~60% of per-core VMEM; conservative default assumes v7x's 64 MiB."""
    cap = 64 * 1024 * 1024
    try:
        cap = int(getattr(pltpu.get_tpu_info(), "vmem_capacity_bytes", cap))
    except Exception:
        pass
    return max(int(cap * 0.6), 32 * 1024 * 1024)


def _choose_batch_tile(B, Kp, Lp, in_itemsize, out_itemsize, budget):
    """Largest batch tile whose double-buffered working set fits the VMEM budget."""
    per_row = 2 * (Kp * Lp * in_itemsize      # logits in (double buffered)
                   + Kp * Lp * out_itemsize   # label_lp out
                   + Lp * 4                   # marg out (f32)
                   + Kp * 128 * 4             # latent_lp in (lane padded to 128)
                   + 128 * 4)                 # labels in (lane padded)
    tb = max(8, (budget // per_row) // 8 * 8)
    if B <= tb:
        return B, B                            # single block, no batch padding
    nb = -(-B // tb)
    tb = _round_up(-(-B // nb), 8)             # rebalance tiles to minimize padding
    return tb, nb * tb


def _marginalizer_kernel(logits_ref, latent_ref, labels_ref,
                         loss_ref, marg_ref, label_lp_ref):
    x = logits_ref[...].astype(jnp.float32)            # (TB, Kp, Lp)
    latent_lp = latent_ref[...]                        # (TB, Kp, 1) f32
    labels = labels_ref[...]                           # (TB, 1) int32

    # log_softmax over labels (lane axis) -- the only full-size exp in the kernel.
    l_max = jnp.max(x, axis=-1, keepdims=True)         # (TB, Kp, 1)
    l_shift = x - l_max
    e = jnp.exp(l_shift)                               # (TB, Kp, Lp)
    l_lse = jnp.log(jnp.sum(e, axis=-1, keepdims=True))
    label_lp_ref[...] = (l_shift - l_lse).astype(label_lp_ref.dtype)

    # logsumexp over K of joint = (l_shift - l_lse) + latent_lp, reusing `e`.
    # max_L(l_shift) == 0, so max_{K,L}(joint) == max_K(c) with c = latent_lp - l_lse:
    # the max-subtracted correction exp(c - m) is only (TB, Kp, 1) shaped.
    c = latent_lp - l_lse                              # (TB, Kp, 1)
    m = jnp.max(c, axis=1, keepdims=True)              # (TB, 1, 1)
    w = jnp.exp(c - m)                                 # (TB, Kp, 1) small exp
    s = jnp.sum(e * w, axis=1)                         # (TB, Lp)
    marg = jnp.log(s) + m[:, 0, :]                     # (TB, Lp)
    marg_ref[...] = marg

    # Per-tile partial NLL sum (pure VPU one-hot). ignore_index / batch-pad rows never
    # match any column (col >= 0), so they contribute exactly 0.
    col = jax.lax.broadcasted_iota(jnp.int32, marg.shape, 1)
    picked = jnp.where(col == labels, marg, 0.0)
    partial = -jnp.sum(picked)
    # Lane-dense (1, 8, 128) slab write of the broadcast scalar (unmasked vst).
    loss_ref[...] = jnp.full(loss_ref.shape, partial, dtype=jnp.float32)


@functools.partial(jax.jit, static_argnames=("ignore_index",))
def marginalizer_forward(logits, labels, retrieval_scores, ignore_index=-100):
    """logits (B,K,L), labels (B,) int, retrieval_scores (B,K).

    Returns (loss, marginal_logprobs, label_logprobs, latent_logprobs),
    matching PyTorch Marginalizer.forward (NLLLoss mean over labels != ignore_index).
    """
    B, K, L = logits.shape

    # Tiny (B,K) log_softmax: do it in XLA; it is also one of the module outputs.
    latent_lp = jax.nn.log_softmax(retrieval_scores.astype(jnp.float32), axis=-1)

    Kp = _round_up(K, 8)
    Lp = _round_up(L, 128)
    in_sz = jnp.dtype(logits.dtype).itemsize
    budget = _vmem_budget_bytes()
    TB, B_pad = _choose_batch_tile(B, Kp, Lp, in_sz, in_sz, budget)
    NB = B_pad // TB
    # TODO(synk): if a single batch row (Kp*Lp) ever exceeds the VMEM budget, tiling
    # over K with an in-kernel running logsumexp would be needed; not required here.

    logits_in = logits
    if (B_pad, Kp, Lp) != (B, K, L):
        logits_in = jnp.pad(logits, ((0, B_pad - B), (0, Kp - K), (0, Lp - L)),
                            constant_values=_NEG)
    latent_in = latent_lp
    if (B_pad, Kp) != (B, K):
        latent_in = jnp.pad(latent_lp, ((0, B_pad - B), (0, Kp - K)),
                            constant_values=_NEG)
    latent_in = latent_in.reshape(B_pad, Kp, 1)

    labels_i32 = labels.astype(jnp.int32)
    labels_in = labels_i32
    if B_pad != B:
        labels_in = jnp.pad(labels_i32, ((0, B_pad - B),),
                            constant_values=ignore_index)
    labels_in = labels_in.reshape(B_pad, 1)

    loss_parts, marg_p, label_lp_p = pl.pallas_call(
        _marginalizer_kernel,
        out_shape=(
            jax.ShapeDtypeStruct((NB, 8, 128), jnp.float32),      # per-tile -sum
            jax.ShapeDtypeStruct((B_pad, Lp), jnp.float32),       # marginal_logprobs
            jax.ShapeDtypeStruct((B_pad, Kp, Lp), logits.dtype),  # label_logprobs
        ),
        grid=(NB,),
        in_specs=[
            pl.BlockSpec((TB, Kp, Lp), lambda b: (b, 0, 0)),      # logits
            pl.BlockSpec((TB, Kp, 1), lambda b: (b, 0, 0)),       # latent logprobs
            pl.BlockSpec((TB, 1), lambda b: (b, 0)),              # labels
        ],
        out_specs=(
            pl.BlockSpec((1, 8, 128), lambda b: (b, 0, 0)),
            pl.BlockSpec((TB, Lp), lambda b: (b, 0)),
            pl.BlockSpec((TB, Kp, Lp), lambda b: (b, 0, 0)),
        ),
        compiler_params=pltpu.CompilerParams(
            dimension_semantics=("parallel",),
            vmem_limit_bytes=int(budget),
        ),
    )(logits_in, latent_in, labels_in)

    # NLLLoss 'mean' with ignore_index: divide by the number of counted labels.
    n_valid = jnp.sum((labels_i32 != ignore_index).astype(jnp.float32))
    loss = jnp.sum(loss_parts[:, 0, 0]) / jnp.maximum(n_valid, 1.0)

    marg = marg_p[:B, :L]
    label_lp = label_lp_p[:B, :K, :L]
    return loss, marg, label_lp, latent_lp


def _reference(logits, labels, retrieval_scores, ignore_index=-100):
    lat = jax.nn.log_softmax(retrieval_scores.astype(jnp.float32), axis=-1)
    lab = jax.nn.log_softmax(logits.astype(jnp.float32), axis=-1)
    joint = lab + lat[:, :, None]
    marg = jax.scipy.special.logsumexp(joint, axis=1)
    valid = labels != ignore_index
    safe = jnp.where(valid, labels, 0)
    picked = marg[jnp.arange(labels.shape[0]), safe]
    loss = -jnp.sum(jnp.where(valid, picked, 0.0)) / jnp.maximum(jnp.sum(valid), 1)
    return loss, marg, lab, lat


if __name__ == "__main__":
    # Test 1: aligned shapes (K % 8 == 0, L % 128 == 0), all labels valid.
    B, K, L = 2, 8, 128
    k1, k2, k3 = jax.random.split(jax.random.PRNGKey(0), 3)
    logits = jax.random.normal(k1, (B, K, L), dtype=jnp.float32)
    scores = jax.random.normal(k2, (B, K), dtype=jnp.float32)
    labels = jax.random.randint(k3, (B,), 0, L, dtype=jnp.int32)

    out = marginalizer_forward(logits, labels, scores)
    jax.block_until_ready(out)
    loss, marg, label_lp, latent_lp = out
    r_loss, r_marg, r_lab, r_lat = _reference(logits, labels, scores)
    assert jnp.allclose(latent_lp, r_lat, atol=1e-5), "latent_logprobs mismatch"
    assert jnp.allclose(label_lp, r_lab, atol=1e-5), "label_logprobs mismatch"
    assert jnp.allclose(marg, r_marg, atol=1e-5), "marginal_logprobs mismatch"
    assert jnp.allclose(loss, r_loss, atol=1e-5), "loss mismatch"

    # Test 2: unaligned shapes exercising the K/L padding path + ignore_index=-100.
    B2, K2, L2 = 3, 5, 37
    k4, k5, k6 = jax.random.split(jax.random.PRNGKey(0), 3)
    logits2 = jax.random.normal(k4, (B2, K2, L2), dtype=jnp.float32)
    scores2 = jax.random.normal(k5, (B2, K2), dtype=jnp.float32)
    labels2 = jax.random.randint(k6, (B2,), 0, L2, dtype=jnp.int32)
    labels2 = labels2.at[1].set(-100)  # ignored row

    out2 = marginalizer_forward(logits2, labels2, scores2)
    jax.block_until_ready(out2)
    loss2, marg2, label_lp2, latent_lp2 = out2
    r_loss2, r_marg2, r_lab2, r_lat2 = _reference(logits2, labels2, scores2)
    assert jnp.allclose(latent_lp2, r_lat2, atol=1e-5), "latent_logprobs mismatch (padded)"
    assert jnp.allclose(label_lp2, r_lab2, atol=1e-5), "label_logprobs mismatch (padded)"
    assert jnp.allclose(marg2, r_marg2, atol=1e-5), "marginal_logprobs mismatch (padded)"
    assert jnp.allclose(loss2, r_loss2, atol=1e-5), "loss mismatch (padded)"

    print("KERNEL_OK")
</pallas_src>

<mosaic_0001>
module attributes {stable_mosaic.version = 11 : i64} {
  func.func @_marginalizer_kernel(%arg0: i32, %arg1: memref<2x8x128xf32, #tpu.memory_space<vmem>>, %arg2: memref<2x8x1xf32, #tpu.memory_space<vmem>>, %arg3: memref<2x1xi32, #tpu.memory_space<vmem>>, %arg4: memref<1x8x128xf32, #tpu.memory_space<vmem>>, %arg5: memref<2x128xf32, #tpu.memory_space<vmem>>, %arg6: memref<2x8x128xf32, #tpu.memory_space<vmem>>) attributes {dimension_semantics = [#tpu.dimension_semantics<parallel>], iteration_bounds = array<i64: 1>, scalar_prefetch = 0 : i64, scratch_operands = 0 : i64, tpu.core_type = #tpu.core_type<tc>, window_params = [{transform_indices = @transform_0, window_bounds = array<i64: 2, 8, 128>}, {transform_indices = @transform_1, window_bounds = array<i64: 2, 8, 1>}, {transform_indices = @transform_2, window_bounds = array<i64: 2, 1>}, {transform_indices = @transform_3, window_bounds = array<i64: 1, 8, 128>}, {transform_indices = @transform_4, window_bounds = array<i64: 2, 128>}, {transform_indices = @transform_5, window_bounds = array<i64: 2, 8, 128>}]} {
    %c0 = arith.constant 0 : index
    %c0_0 = arith.constant 0 : index
    %c0_1 = arith.constant 0 : index
    %0 = vector.load %arg1[%c0, %c0_0, %c0_1] : memref<2x8x128xf32, #tpu.memory_space<vmem>>, vector<2x8x128xf32>
    %c0_2 = arith.constant 0 : index
    %c0_3 = arith.constant 0 : index
    %c0_4 = arith.constant 0 : index
    %1 = vector.load %arg2[%c0_2, %c0_3, %c0_4] : memref<2x8x1xf32, #tpu.memory_space<vmem>>, vector<2x8x1xf32>
    %c0_5 = arith.constant 0 : index
    %c0_6 = arith.constant 0 : index
    %2 = vector.load %arg3[%c0_5, %c0_6] : memref<2x1xi32, #tpu.memory_space<vmem>>, vector<2x1xi32>
    %cst = arith.constant dense<0xFF800000> : vector<2x8xf32>
    %3 = vector.multi_reduction <maximumf>, %0, %cst [2] : vector<2x8x128xf32> to vector<2x8xf32>
    %4 = vector.shape_cast %3 : vector<2x8xf32> to vector<2x8x1xf32>
    %5 = vector.broadcast %4 : vector<2x8x1xf32> to vector<2x8x128xf32>
    %6 = arith.subf %0, %5 : vector<2x8x128xf32>
    %7 = math.exp %6 : vector<2x8x128xf32>
    %cst_7 = arith.constant dense<0.000000e+00> : vector<2x8xf32>
    %8 = vector.multi_reduction <add>, %7, %cst_7 [2] : vector<2x8x128xf32> to vector<2x8xf32>
    %9 = vector.shape_cast %8 : vector<2x8xf32> to vector<2x8x1xf32>
    %10 = math.log %9 : vector<2x8x1xf32>
    %11 = vector.broadcast %10 : vector<2x8x1xf32> to vector<2x8x128xf32>
    %12 = arith.subf %6, %11 : vector<2x8x128xf32>
    %c0_8 = arith.constant 0 : index
    %c0_9 = arith.constant 0 : index
    %c0_10 = arith.constant 0 : index
    %13 = vector.load %arg6[%c0_8, %c0_9, %c0_10] : memref<2x8x128xf32, #tpu.memory_space<vmem>>, vector<2x8x128xf32>
    tpu.vector_store %arg6[%c0_8, %c0_9, %c0_10], %12 {strides = array<i32>} : memref<2x8x128xf32, #tpu.memory_space<vmem>>, vector<2x8x128xf32>,
    %14 = arith.subf %1, %10 : vector<2x8x1xf32>
    %cst_11 = arith.constant dense<0xFF800000> : vector<2x1xf32>
    %15 = vector.multi_reduction <maximumf>, %14, %cst_11 [1] : vector<2x8x1xf32> to vector<2x1xf32>
    %16 = vector.shape_cast %15 : vector<2x1xf32> to vector<2x1x1xf32>
    %17 = vector.broadcast %16 : vector<2x1x1xf32> to vector<2x8x1xf32>
    %18 = arith.subf %14, %17 : vector<2x8x1xf32>
    %19 = math.exp %18 : vector<2x8x1xf32>
    %20 = vector.broadcast %19 : vector<2x8x1xf32> to vector<2x8x128xf32>
    %21 = arith.mulf %7, %20 : vector<2x8x128xf32>
    %cst_12 = arith.constant dense<0.000000e+00> : vector<2x128xf32>
    %22 = vector.multi_reduction <add>, %21, %cst_12 [1] : vector<2x8x128xf32> to vector<2x128xf32>
    %23 = math.log %22 : vector<2x128xf32>
    %24 = vector.shape_cast %16 : vector<2x1x1xf32> to vector<2x1xf32>
    %25 = vector.broadcast %24 : vector<2x1xf32> to vector<2x128xf32>
    %26 = arith.addf %23, %25 : vector<2x128xf32>
    %c0_13 = arith.constant 0 : index
    %c0_14 = arith.constant 0 : index
    %27 = vector.load %arg5[%c0_13, %c0_14] : memref<2x128xf32, #tpu.memory_space<vmem>>, vector<2x128xf32>
    tpu.vector_store %arg5[%c0_13, %c0_14], %26 {strides = array<i32>} : memref<2x128xf32, #tpu.memory_space<vmem>>, vector<2x128xf32>,
    %28 = tpu.iota {dimensions = array<i32: 1>} : vector<2x128xi32>
    %29 = vector.broadcast %2 : vector<2x1xi32> to vector<2x128xi32>
    %30 = arith.cmpi eq, %28, %29 : vector<2x128xi32>
    %cst_15 = arith.constant 0.000000e+00 : f32
    %31 = vector.broadcast %cst_15 : f32 to vector<2x128xf32>
    %32 = arith.select %30, %26, %31 : vector<2x128xi1>, vector<2x128xf32>
    %33 = vector.shape_cast %32 : vector<2x128xf32> to vector<1x2x128xf32>
    %cst_16 = arith.constant dense<0.000000e+00> : vector<1xf32>
    %34 = vector.multi_reduction <add>, %33, %cst_16 [1, 2] : vector<1x2x128xf32> to vector<1xf32>
    %35 = vector.shape_cast %34 : vector<1xf32> to vector<1x1x1xf32>
    %36 = vector.extract %35[0, 0, 0] : f32 from vector<1x1x1xf32>
    %cst_17 = arith.constant 0.000000e+00 : f32
    %37 = arith.subf %cst_17, %36 : f32
    %38 = vector.broadcast %37 : f32 to vector<1x8x128xf32>
    %c0_18 = arith.constant 0 : index
    %c0_19 = arith.constant 0 : index
    %c0_20 = arith.constant 0 : index
    %39 = vector.load %arg4[%c0_18, %c0_19, %c0_20] : memref<1x8x128xf32, #tpu.memory_space<vmem>>, vector<1x8x128xf32>
    tpu.vector_store %arg4[%c0_18, %c0_19, %c0_20], %38 {strides = array<i32>} : memref<1x8x128xf32, #tpu.memory_space<vmem>>, vector<1x8x128xf32>,
    return
  }
  func.func @transform_0(%arg0: i32) -> (i32, i32, i32) {
    %c0_i32 = arith.constant 0 : i32
    %c0_i32_0 = arith.constant 0 : i32
    %c0_i32_1 = arith.constant 0 : i32
    return %arg0, %c0_i32, %c0_i32_0 : i32, i32, i32
  }
  func.func @transform_1(%arg0: i32) -> (i32, i32, i32) {
    %c0_i32 = arith.constant 0 : i32
    %c0_i32_0 = arith.constant 0 : i32
    %c0_i32_1 = arith.constant 0 : i32
    return %arg0, %c0_i32, %c0_i32_0 : i32, i32, i32
  }
  func.func @transform_2(%arg0: i32) -> (i32, i32) {
    %c0_i32 = arith.constant 0 : i32
    %c0_i32_0 = arith.constant 0 : i32
    return %arg0, %c0_i32 : i32, i32
  }
  func.func @transform_3(%arg0: i32) -> (i32, i32, i32) {
    %c0_i32 = arith.constant 0 : i32
    %c0_i32_0 = arith.constant 0 : i32
    %c0_i32_1 = arith.constant 0 : i32
    return %arg0, %c0_i32, %c0_i32_0 : i32, i32, i32
  }
  func.func @transform_4(%arg0: i32) -> (i32, i32) {
    %c0_i32 = arith.constant 0 : i32
    %c0_i32_0 = arith.constant 0 : i32
    return %arg0, %c0_i32 : i32, i32
  }
  func.func @transform_5(%arg0: i32) -> (i32, i32, i32) {
    %c0_i32 = arith.constant 0 : i32
    %c0_i32_0 = arith.constant 0 : i32
    %c0_i32_1 = arith.constant 0 : i32
    return %arg0, %c0_i32, %c0_i32_0 : i32, i32, i32
  }
}

</mosaic_0001>

<llo_original>
// kernel: marginalizer_forward.1
$region0: #{marginalizer_forward.1}
  #allocation0 [shape = 'u32[]', space=smem, size = 0x4, offset = 0x4, fixed_abs, tag = 'smem constant byte address 0x4 - core index']
  #allocation1 [shape = 'u32[144,128]{1,0:T(1,128)}', space=vmem, size = 0x12000, scoped, tag = 'internal scratch']
  %s0 = inlined_call_operand.vmem [shape: f32[2,8,128], index: 0, kind: input, shape index: {}]
  %s1 = inlined_call_operand.vmem [shape: f32[2,8,1], index: 1, kind: input, shape index: {}]
  %s2 = inlined_call_operand.vmem [shape: s32[2,1], index: 2, kind: input, shape index: {}]
  %s3 = inlined_call_operand.vmem [shape: f32[1,8,128], index: 3, kind: output, shape index: {0}]
  %s4 = inlined_call_operand.hbm [shape: f32[2,128], index: 4, kind: output, shape index: {1}]
  %s5 = inlined_call_operand.hbm [shape: f32[2,8,128], index: 5, kind: output, shape index: {2}]
  %6 = xla_tuple %s3, %s4, %s5
  %s7 = sld [smem:[#allocation0]]
  $region38: #{marginalizer_forward.1} parent=0
    _
  %s9 = ssub.s32 1, %s7
  %s10 = scalar_select 0, %s9, %s7
  $region1: #{marginalizer_forward.1} parent=0
    #allocation2 [shape = 'u8[1024]{0}', space=vmem, size = 0x400, scoped, tag = 'output window, operand 1, single buffered']
    #allocation3 [shape = 's32[1]{0}', space=sflag, size = 0x4, scoped, tag = 'scoped memory for marginalizer_forward.1']
    #allocation4 [shape = 'u8[8192]{0}', space=vmem, size = 0x2000, scoped, tag = 'output window, operand 2, single buffered']
    #allocation5 [shape = 's32[1]{0}', space=sflag, size = 0x4, scoped, tag = 'scoped memory for marginalizer_forward.1']
    %11 = vsyncpa [#allocation3], 0
    %12 = vsyncpa [#allocation5], 0
    // Predicated region
    $region2: #{marginalizer_forward.1} parent=1 // pred_check
      _
    $region3: #{marginalizer_forward.1} parent=1 // pred_check_branch
      %14 = sbr.rel (0) target = $region5
    $region4: #{marginalizer_forward.1} parent=1 // pred_region
      _
    $region5: #{marginalizer_forward.1} parent=1 // pred_fallthru
      _
    // Predicated region
    $region6: #{marginalizer_forward.1} parent=1 // pred_check
      _
    $region7: #{marginalizer_forward.1} parent=1 // pred_check_branch
      %16 = sbr.rel (0) target = $region9
    $region8: #{marginalizer_forward.1} parent=1 // pred_region
      _
    $region9: #{marginalizer_forward.1} parent=1 // pred_fallthru
      _
    // Predicated region
    $region10: #{marginalizer_forward.1} parent=1 // pred_check
      _
    $region11: #{marginalizer_forward.1} parent=1 // pred_check_branch
      %18 = sbr.rel (0) target = $region13
    $region12: #{marginalizer_forward.1} parent=1 // pred_region
      _
    $region13: #{marginalizer_forward.1} parent=1 // pred_fallthru
      _
    %v19 = vld [vmem:[%s0] sm:$0xff]
    %v20 = vld [vmem:[%s0 + $0x8] sm:$0xff]
    %v21 = vld [vmem:[%s1] sm:$0xff]
    %v22 = vld [vmem:[%s1 + $0x8] sm:$0xff]
    %v23 = vld [vmem:[%s2] sm:$0x3]
    %24 = vmax.xlane.f32.xlu0 %v19
    %v25 = vpop.xlane.xlu0 %24
    %26 = vmax.xlane.f32.xlu0 %v20
    %v27 = vpop.xlane.xlu0 %26
    %v28 = vsub.f32 %v19, %v25
    %v29 = vsub.f32 %v20, %v27
    %v30 = vmul.f32 %v28, 1.442695
    %v31 = vpow.pop %v30
    %v32 = vmul.f32 %v29, 1.442695
    %v33 = vpow.pop %v32
    %34 = vadd.xlane.f32.xlu0 %v31
    %v35 = vpop.xlane.xlu0 %34
    %36 = vadd.xlane.f32.xlu0 %v33
    %v37 = vpop.xlane.xlu0 %36
    %v38 = vlog2.pop %v35
    %v39 = vmul.f32 %v38, 0.6931472
    %v40 = vlog2.pop %v37
    %v41 = vmul.f32 %v40, 0.6931472
    %v42 = vsub.f32 %v28, %v39
    %v43 = vsub.f32 %v29, %v41
    %44 = vst [vmem:[#allocation4] sm:$0xff] %v42
    %45 = vst [vmem:[#allocation4 + $0x8] sm:$0xff] %v43
    %v46 = vsub.f32 %v21, %v39
    %v47 = vsub.f32 %v22, %v41
    %vm48 = vcmask 7168
    %v49 = vsel %vm48, %v46, -inf
    %v50 = vrot.slane %v49, 4
    %v51 = vmax.f32 %v49, %v50
    %v52 = vrot.slane %v51, 2
    %v53 = vmax.f32 %v51, %v52
    %v54 = vrot.slane %v53, 1
    %v55 = vmax.f32 %v53, %v54
    %v56 = vsel %vm48, %v47, -inf
    %v57 = vrot.slane %v56, 4
    %v58 = vmax.f32 %v56, %v57
    %v59 = vrot.slane %v58, 2
    %v60 = vmax.f32 %v58, %v59
    %v61 = vrot.slane %v60, 1
    %v62 = vmax.f32 %v60, %v61
    %v63 = vsub.f32 %v46, %v55
    %v64 = vsub.f32 %v47, %v62
    %v65 = vmul.f32 %v63, 1.442695
    %v66 = vpow.pop %v65
    %v67 = vmul.f32 %v64, 1.442695
    %v68 = vpow.pop %v67
    %70 = vset.pattern.permute.xlu0 0
    %71 = vperm.xlu0 %70, %v66
    %v72 = vpop.permute.xlu0 %71
    %75 = vset.pattern.permute.xlu0 0
    %76 = vperm.xlu0 %75, %v68
    %v77 = vpop.permute.xlu0 %76
    %v79 = vmul.f32 %v31, %v72
    %v80 = vmul.f32 %v33, %v77
    %v81 = vrot.slane %v79, 4
    %v82 = vadd.f32 %v79, %v81
    %v83 = vrot.slane %v82, 2
    %v84 = vadd.f32 %v82, %v83
    %v85 = vrot.slane %v84, 1
    %v86 = vadd.f32 %v84, %v85
    %v87 = vrot.slane %v80, 4
    %v88 = vadd.f32 %v80, %v87
    %v89 = vrot.slane %v88, 2
    %v90 = vadd.f32 %v88, %v89
    %v91 = vrot.slane %v90, 1
    %v92 = vadd.f32 %v90, %v91
    %v93 = vlog2.pop %v86
    %v94 = vmul.f32 %v93, 0.6931472
    %v95 = vlog2.pop %v92
    %v96 = vmul.f32 %v95, 0.6931472
    %98 = vset.pattern.permute.xlu0 0
    %99 = vperm.xlu0 %98, %v55
    %v100 = vpop.permute.xlu0 %99
    %103 = vset.pattern.permute.xlu0 0
    %104 = vperm.xlu0 %103, %v62
    %v105 = vpop.permute.xlu0 %104
    %v107 = vadd.f32 %v94, %v100
    %v108 = vadd.f32 %v96, %v105
    %vm111 = vcmask 1041409
    %v112 = vsel %vm111, %v108, %v107
    %114 = vst [vmem:[#allocation2] sm:$0x3] %v112
    %v115 = vlaneseq
    %v116 = vand.u32 %v115, 127
    %117 = vset.pattern.permute.xlu0 0
    %118 = vperm.xlu0 %117, %v23
    %v119 = vpop.permute.xlu0 %118
    %vm120 = vcmp.eq.s32.totalorder %v116, %v119
    %v121 = vsel %vm120, %v112, 0.0
    %vm122 = vcmask 1041408
    %v123 = vsel %vm122, %v121, 0.0
    %124 = vadd.xlane.f32.xlu0 %v123
    %v125 = vpop.xlane.xlu0 %124
    %v126 = vrot.slane %v125, 4
    %v127 = vadd.f32 %v125, %v126
    %v128 = vrot.slane %v127, 2
    %v129 = vadd.f32 %v127, %v128
    %v130 = vrot.slane %v129, 1
    %v131 = vadd.f32 %v129, %v130
    %s132 = vtos %v131
    %s133 = ssub.f32 0.0, %s132
    %v134 = vstv %s133
    %135 = vst [vmem:[%s3] sm:$0xff] %v134
    // Predicated region
    $region14: #{marginalizer_forward.1} parent=1 // pred_check
      _
    $region15: #{marginalizer_forward.1} parent=1 // pred_check_branch
      %137 = sbr.rel (0) target = $region17
    $region16: #{marginalizer_forward.1} parent=1 // pred_region
      _
    $region17: #{marginalizer_forward.1} parent=1 // pred_fallthru
      _
    // Predicated region
    $region18: #{marginalizer_forward.1} parent=1 // pred_check
      _
    $region19: #{marginalizer_forward.1} parent=1 // pred_check_branch
      %139 = sbr.rel (0) target = $region21
    $region20: #{marginalizer_forward.1} parent=1 // pred_region
      %s141 = ssub.s32 32, 32
      %142 = vsyncadd [#allocation3], %s141
      %s144 = sshll.u32 [#allocation2], 4
      %s145 = int_to_ptr.vmem [resolvable:$true] %s144
      %147 = dma.vmem_to_hbm [thread:$0]  %s145, 32, %s4, [#allocation3]
    $region21: #{marginalizer_forward.1} parent=1 // pred_fallthru
      _
    // Predicated region
    $region22: #{marginalizer_forward.1} parent=1 // pred_check
      _
    $region23: #{marginalizer_forward.1} parent=1 // pred_check_branch
      %149 = sbr.rel (0) target = $region25
    $region24: #{marginalizer_forward.1} parent=1 // pred_region
      %s151 = ssub.s32 256, 256
      %152 = vsyncadd [#allocation5], %s151
      %s153 = sshll.u32 [#allocation4], 4
      %s154 = int_to_ptr.vmem [resolvable:$true] %s153
      %159 = dma.vmem_to_hbm [thread:$0]  %s154, 256, %s5, [#allocation5], 128, 128, 8
    $region25: #{marginalizer_forward.1} parent=1 // pred_fallthru
      _
    // Predicated region
    $region26: #{marginalizer_forward.1} parent=1 // pred_check
      _
    $region27: #{marginalizer_forward.1} parent=1 // pred_check_branch
      %161 = sbr.rel (0) target = $region29
    $region28: #{marginalizer_forward.1} parent=1 // pred_region
      _
    $region29: #{marginalizer_forward.1} parent=1 // pred_fallthru
      _
    // Predicated region
    $region30: #{marginalizer_forward.1} parent=1 // pred_check
      _
    $region31: #{marginalizer_forward.1} parent=1 // pred_check_branch
      %163 = sbr.rel (0) target = $region33
    $region32: #{marginalizer_forward.1} parent=1 // pred_region
      %164 = dma.done [#allocation3], 32
    $region33: #{marginalizer_forward.1} parent=1 // pred_fallthru
      _
    // Predicated region
    $region34: #{marginalizer_forward.1} parent=1 // pred_check
      _
    $region35: #{marginalizer_forward.1} parent=1 // pred_check_branch
      %166 = sbr.rel (0) target = $region37
    $region36: #{marginalizer_forward.1} parent=1 // pred_region
      %167 = dma.done [#allocation5], 256
    $region37: #{marginalizer_forward.1} parent=1 // pred_fallthru
      _
    %168 = vsyncpa [#allocation3], 1
    %169 = vsyncpa [#allocation5], 1

</llo_original>
